<compile_context>
chip_gen: v7x
topology: tpu7x:2x2x1
jax: 0.10.0
libtpu: 0.0.40
codegen_flags: <defaults>
</compile_context>

<pallas_src>
import functools
import math

import jax
import jax.numpy as jnp
from jax.experimental import pallas as pl
from jax.experimental.pallas import tpu as pltpu

_LANES = 128
_SUBLANES = 8

_EPS = 1e-7
_LOG_EPS = math.log(_EPS)            # log(eps)      ~= -16.118
_LOG_1MEPS = math.log1p(-_EPS)       # log(1 - eps)  ~= -1.0000000494e-07

# Pad value for the (<128 element) ragged tail: sigmoid(-100) clips to eps,
# target 0 => loss = (1-alpha)*eps^gamma*|log(1-eps)| ~= 7.5e-22 per element.
_PAD_LOGIT = -100.0


def _int_pow(x, n):
    """x**n for small non-negative integer n via explicit VPU multiplies."""
    if n == 0:
        return jnp.ones_like(x)
    r = x
    for _ in range(n - 1):
        r = r * x
    return r


def _focal_loss_kernel(logits_ref, targets_ref, out_ref, *,
                       alpha, gamma, rows, block_rows, needs_row_mask):
    x = logits_ref[...].astype(jnp.float32)
    t = targets_ref[...].astype(jnp.float32)

    # Clipped sigmoid (same clamp as the reference).
    p = jnp.clip(jax.nn.sigmoid(x), _EPS, 1.0 - _EPS)
    q = 1.0 - p

    # Single EUP log; log(1-p) via the log-sigmoid identity, clipped to the
    # exact range the reference's clamp-then-log produces.
    log_p = jnp.log(p)
    log_q = jnp.clip(log_p - x, _LOG_EPS, _LOG_1MEPS)

    g = float(gamma)
    if g == int(g) and 0 <= int(g) <= 4:
        # Default gamma=2.0: pure VPU multiplies.
        pow_q = _int_pow(q, int(g))        # (1 - p)^gamma
        pow_p = _int_pow(p, int(g))        # p^gamma
    else:
        # Reuse the logs we already have: one EUP exp per pow, no extra log.
        pow_q = jnp.exp(g * log_q)
        pow_p = jnp.exp(g * log_p)

    loss = ((-alpha) * pow_q * t * log_p
            + (alpha - 1.0) * pow_p * (1.0 - t) * log_q)

    if needs_row_mask:
        # Only the last block can be partial; rows past `rows` hold unspecified
        # data (possibly NaN) and must be dropped via a select.
        row = jax.lax.broadcasted_iota(jnp.int32, loss.shape, 0)
        valid_rows = rows - pl.program_id(0) * block_rows
        loss = jnp.where(row < valid_rows, loss, 0.0)

    # Per-block scalar partial; the wrapper sums partials and divides by total.
    out_ref[0, 0] = jnp.sum(loss)


def binary_focal_loss(logits, targets, alpha=0.25, gamma=2.0, block_rows=4096):
    """Mean binary focal loss over all elements of `logits` / `targets`."""
    assert logits.shape == targets.shape
    total = int(logits.size)
    assert total > 0

    # Flatten (free reshape of contiguous data).
    logits_flat = logits.reshape(-1)
    targets_flat = targets.reshape(-1)

    # Minimal padding to a lane multiple, with a benign tail (no mask needed).
    pad = (-total) % _LANES
    if pad:
        logits_flat = jnp.pad(logits_flat, (0, pad), constant_values=_PAD_LOGIT)
        targets_flat = jnp.pad(targets_flat, (0, pad))

    rows = (total + pad) // _LANES
    logits2d = logits_flat.reshape(rows, _LANES)
    targets2d = targets_flat.reshape(rows, _LANES)

    block_rows = int(block_rows)
    if block_rows >= rows:
        block_rows = rows                       # single block == full dim (always legal)
    else:
        block_rows = max(_SUBLANES, (block_rows // _SUBLANES) * _SUBLANES)
    num_blocks = -(-rows // block_rows)
    needs_row_mask = (num_blocks * block_rows) != rows

    kernel = functools.partial(
        _focal_loss_kernel,
        alpha=float(alpha),
        gamma=float(gamma),
        rows=rows,
        block_rows=block_rows,
        needs_row_mask=needs_row_mask,
    )

    bytes_accessed = int(logits2d.size * logits2d.dtype.itemsize
                         + targets2d.size * targets2d.dtype.itemsize
                         + num_blocks * 4)
    cost = pl.CostEstimate(
        flops=20 * rows * _LANES,
        transcendentals=2 * rows * _LANES,
        bytes_accessed=bytes_accessed,
    )

    partials = pl.pallas_call(
        kernel,
        out_shape=jax.ShapeDtypeStruct((num_blocks, 1), jnp.float32),
        grid_spec=pltpu.PrefetchScalarGridSpec(
            num_scalar_prefetch=0,
            grid=(num_blocks,),
            in_specs=[
                pl.BlockSpec((block_rows, _LANES), lambda i: (i, 0)),
                pl.BlockSpec((block_rows, _LANES), lambda i: (i, 0)),
            ],
            out_specs=pl.BlockSpec(
                (1, 1), lambda i: (i, 0),
                memory_space=pltpu.MemorySpace.SMEM,
            ),
        ),
        compiler_params=pltpu.CompilerParams(
            # Every block is independent -> parallel grid axis (2-TC split on v7x).
            dimension_semantics=("parallel",),
            vmem_limit_bytes=32 * 1024 * 1024,
        ),
        cost_estimate=cost,
    )(logits2d, targets2d)

    return jnp.sum(partials) / jnp.float32(total)


def _reference_focal_loss(logits, targets, alpha=0.25, gamma=2.0):
    probs = jnp.clip(jax.nn.sigmoid(logits.astype(jnp.float32)), _EPS, 1.0 - _EPS)
    t = targets.astype(jnp.float32)
    loss_pos = -alpha * (1.0 - probs) ** gamma * t * jnp.log(probs)
    loss_neg = -(1.0 - alpha) * probs ** gamma * (1.0 - t) * jnp.log(1.0 - probs)
    return jnp.mean(loss_pos + loss_neg)


if __name__ == "__main__":
    key = jax.random.PRNGKey(0)
    k1, k2, k3, k4, k5, k6 = jax.random.split(key, 6)

    # Case 1: lane-aligned shape -> no padding, single block, no mask.
    shape_a = (16, 128)
    logits_a = jax.random.normal(k1, shape_a, dtype=jnp.float32) * 2.0
    targets_a = (jax.random.uniform(k2, shape_a) > 0.5).astype(jnp.float32)
    loss_a = jax.block_until_ready(binary_focal_loss(logits_a, targets_a))
    ref_a = jax.block_until_ready(_reference_focal_loss(logits_a, targets_a))
    assert jnp.allclose(loss_a, ref_a, rtol=2e-5, atol=2e-6), (loss_a, ref_a)

    # Case 2: ragged shape (total % 128 != 0) -> exercises the benign-pad tail.
    shape_b = (5, 300)
    logits_b = jax.random.normal(k3, shape_b, dtype=jnp.float32) * 2.0
    targets_b = (jax.random.uniform(k4, shape_b) > 0.5).astype(jnp.float32)
    loss_b = jax.block_until_ready(binary_focal_loss(logits_b, targets_b))
    ref_b = jax.block_until_ready(_reference_focal_loss(logits_b, targets_b))
    assert jnp.allclose(loss_b, ref_b, rtol=2e-5, atol=2e-6), (loss_b, ref_b)

    # Case 3: multi-block grid with a partial last block (tiny block_rows used
    # only to exercise the row mask + parallel grid + wrapper partial-sum).
    shape_c = (50, 128)
    logits_c = jax.random.normal(k5, shape_c, dtype=jnp.float32) * 2.0
    targets_c = (jax.random.uniform(k6, shape_c) > 0.5).astype(jnp.float32)
    loss_c = jax.block_until_ready(
        binary_focal_loss(logits_c, targets_c, block_rows=8))
    ref_c = jax.block_until_ready(_reference_focal_loss(logits_c, targets_c))
    assert jnp.allclose(loss_c, ref_c, rtol=2e-5, atol=2e-6), (loss_c, ref_c)

    # Case 4: non-integer gamma + non-default alpha -> exercises the exp path
    # and soft-label-safe two-branch formulation.
    loss_d = jax.block_until_ready(
        binary_focal_loss(logits_a, targets_a, alpha=0.4, gamma=1.5))
    ref_d = jax.block_until_ready(
        _reference_focal_loss(logits_a, targets_a, alpha=0.4, gamma=1.5))
    assert jnp.allclose(loss_d, ref_d, rtol=5e-5, atol=5e-6), (loss_d, ref_d)

    print("KERNEL_OK")
</pallas_src>

<mosaic_0001>
module attributes {stable_mosaic.version = 11 : i64} {
  func.func @_focal_loss_kernel(%arg0: i32, %arg1: memref<16x128xf32, #tpu.memory_space<vmem>>, %arg2: memref<16x128xf32, #tpu.memory_space<vmem>>, %arg3: memref<1x1xf32, #tpu.memory_space<smem>>) attributes {dimension_semantics = [#tpu.dimension_semantics<parallel>], iteration_bounds = array<i64: 1>, scalar_prefetch = 0 : i64, scratch_operands = 0 : i64, tpu.core_type = #tpu.core_type<tc>, window_params = [{transform_indices = @transform_0, window_bounds = array<i64: 16, 128>}, {transform_indices = @transform_1, window_bounds = array<i64: 16, 128>}, {transform_indices = @transform_2, window_bounds = array<i64: 1, 1>}]} {
    %c0 = arith.constant 0 : index
    %c0_0 = arith.constant 0 : index
    %0 = vector.load %arg1[%c0, %c0_0] : memref<16x128xf32, #tpu.memory_space<vmem>>, vector<16x128xf32>
    %c0_1 = arith.constant 0 : index
    %c0_2 = arith.constant 0 : index
    %1 = vector.load %arg2[%c0_1, %c0_2] : memref<16x128xf32, #tpu.memory_space<vmem>>, vector<16x128xf32>
    %2 = arith.negf %0 : vector<16x128xf32>
    %3 = math.exp %2 : vector<16x128xf32>
    %cst = arith.constant 1.000000e+00 : f32
    %4 = vector.broadcast %cst : f32 to vector<16x128xf32>
    %5 = arith.addf %4, %3 : vector<16x128xf32>
    %6 = arith.divf %4, %5 : vector<16x128xf32>
    %cst_3 = arith.constant 1.000000e-07 : f32
    %cst_4 = arith.constant 0.99999988 : f32
    %7 = vector.broadcast %cst_3 : f32 to vector<16x128xf32>
    %8 = arith.maximumf %7, %6 : vector<16x128xf32>
    %9 = vector.broadcast %cst_4 : f32 to vector<16x128xf32>
    %10 = arith.minimumf %9, %8 : vector<16x128xf32>
    %cst_5 = arith.constant 1.000000e+00 : f32
    %11 = vector.broadcast %cst_5 : f32 to vector<16x128xf32>
    %12 = arith.subf %11, %10 : vector<16x128xf32>
    %13 = math.log %10 : vector<16x128xf32>
    %14 = arith.subf %13, %0 : vector<16x128xf32>
    %cst_6 = arith.constant -16.1180954 : f32
    %cst_7 = arith.constant -1.00000008E-7 : f32
    %15 = vector.broadcast %cst_6 : f32 to vector<16x128xf32>
    %16 = arith.maximumf %15, %14 : vector<16x128xf32>
    %17 = vector.broadcast %cst_7 : f32 to vector<16x128xf32>
    %18 = arith.minimumf %17, %16 : vector<16x128xf32>
    %19 = arith.mulf %12, %12 : vector<16x128xf32>
    %20 = arith.mulf %10, %10 : vector<16x128xf32>
    %cst_8 = arith.constant -2.500000e-01 : f32
    %21 = vector.broadcast %cst_8 : f32 to vector<16x128xf32>
    %22 = arith.mulf %21, %19 : vector<16x128xf32>
    %23 = arith.mulf %22, %1 : vector<16x128xf32>
    %24 = arith.mulf %23, %13 : vector<16x128xf32>
    %cst_9 = arith.constant -7.500000e-01 : f32
    %25 = vector.broadcast %cst_9 : f32 to vector<16x128xf32>
    %26 = arith.mulf %25, %20 : vector<16x128xf32>
    %cst_10 = arith.constant 1.000000e+00 : f32
    %27 = vector.broadcast %cst_10 : f32 to vector<16x128xf32>
    %28 = arith.subf %27, %1 : vector<16x128xf32>
    %29 = arith.mulf %26, %28 : vector<16x128xf32>
    %30 = arith.mulf %29, %18 : vector<16x128xf32>
    %31 = arith.addf %24, %30 : vector<16x128xf32>
    %32 = vector.shape_cast %31 : vector<16x128xf32> to vector<1x16x128xf32>
    %cst_11 = arith.constant dense<0.000000e+00> : vector<1xf32>
    %33 = vector.multi_reduction <add>, %32, %cst_11 [1, 2] : vector<1x16x128xf32> to vector<1xf32>
    %34 = vector.shape_cast %33 : vector<1xf32> to vector<1x1x1xf32>
    %35 = vector.extract %34[0, 0, 0] : f32 from vector<1x1x1xf32>
    %c0_12 = arith.constant 0 : index
    %c0_13 = arith.constant 0 : index
    %36 = memref.load %arg3[%c0_12, %c0_13] : memref<1x1xf32, #tpu.memory_space<smem>>
    memref.store %35, %arg3[%c0_12, %c0_13] : memref<1x1xf32, #tpu.memory_space<smem>>
    return
  }
  func.func @transform_0(%arg0: i32) -> (i32, i32) {
    %c0_i32 = arith.constant 0 : i32
    %c0_i32_0 = arith.constant 0 : i32
    return %arg0, %c0_i32 : i32, i32
  }
  func.func @transform_1(%arg0: i32) -> (i32, i32) {
    %c0_i32 = arith.constant 0 : i32
    %c0_i32_0 = arith.constant 0 : i32
    return %arg0, %c0_i32 : i32, i32
  }
  func.func @transform_2(%arg0: i32) -> (i32, i32) {
    %c0_i32 = arith.constant 0 : i32
    %c0_i32_0 = arith.constant 0 : i32
    return %arg0, %c0_i32 : i32, i32
  }
}

</mosaic_0001>

<llo_original>
// kernel: tpu_custom_call.1
$region0: #{tpu_custom_call.1}
  #allocation0 [shape = 'u32[]', space=smem, size = 0x4, offset = 0x4, fixed_abs, tag = 'smem constant byte address 0x4 - core index']
  #allocation1 [shape = 'u32[144,128]{1,0:T(1,128)}', space=vmem, size = 0x12000, scoped, tag = 'internal scratch']
  %s0 = inlined_call_operand.hbm [shape: f32[16,128], index: 0, kind: input, shape index: {}]
  %s1 = inlined_call_operand.hbm [shape: f32[16,128], index: 1, kind: input, shape index: {}]
  %s2 = inlined_call_operand.hbm [shape: f32[1,1], index: 2, kind: output, shape index: {}]
  %s3 = sld [smem:[#allocation0]]
  $region26: #{tpu_custom_call.1} parent=0
    _
  %s5 = ssub.s32 1, %s3
  %s6 = scalar_select 0, %s5, %s3
  $region1: #{tpu_custom_call.1} parent=0
    #allocation2 [shape = 'u8[8192]{0}', space=vmem, size = 0x2000, scoped, tag = 'input window, operand 0, single buffered']
    #allocation3 [shape = 's32[1]{0}', space=sflag, size = 0x4, scoped, tag = 'scoped memory for tpu_custom_call.1']
    #allocation4 [shape = 's32[1]{0}', space=sflag, size = 0x4, scoped, tag = 'scoped memory for tpu_custom_call.1']
    #allocation5 [shape = 'u8[8192]{0}', space=vmem, size = 0x2000, scoped, tag = 'input window, operand 1, single buffered']
    #allocation6 [shape = 's32[1]{0}', space=sflag, size = 0x4, scoped, tag = 'scoped memory for tpu_custom_call.1']
    #allocation7 [shape = 'u8[512]{0}', space=smem, size = 0x200, scoped, tag = 'output window, operand 0, single buffered']
    %7 = vsyncpa [#allocation3], 0
    %8 = vsyncpa [#allocation6], 0
    %9 = vsyncpa [#allocation4], 0
    // Predicated region
    $region2: #{tpu_custom_call.1} parent=1 // pred_check
      _
    $region3: #{tpu_custom_call.1} parent=1 // pred_check_branch
      %11 = sbr.rel (0) target = $region5
    $region4: #{tpu_custom_call.1} parent=1 // pred_region
      %s13 = ssub.s32 256, 256
      %14 = vsyncadd [#allocation3], %s13
      %s15 = sshll.u32 [#allocation2], 4
      %s16 = int_to_ptr.vmem [resolvable:$true] %s15
      %21 = dma.hbm_to_vmem [thread:$0]  %s0, 256, %s16, [#allocation3], 128, 128, 8
    $region5: #{tpu_custom_call.1} parent=1 // pred_fallthru
      _
    // Predicated region
    $region6: #{tpu_custom_call.1} parent=1 // pred_check
      _
    $region7: #{tpu_custom_call.1} parent=1 // pred_check_branch
      %23 = sbr.rel (0) target = $region9
    $region8: #{tpu_custom_call.1} parent=1 // pred_region
      %s25 = ssub.s32 256, 256
      %26 = vsyncadd [#allocation6], %s25
      %s27 = sshll.u32 [#allocation5], 4
      %s28 = int_to_ptr.vmem [resolvable:$true] %s27
      %33 = dma.hbm_to_vmem [thread:$0]  %s1, 256, %s28, [#allocation6], 128, 128, 8
    $region9: #{tpu_custom_call.1} parent=1 // pred_fallthru
      _
    // Predicated region
    $region10: #{tpu_custom_call.1} parent=1 // pred_check
      _
    $region11: #{tpu_custom_call.1} parent=1 // pred_check_branch
      %35 = sbr.rel (0) target = $region13
    $region12: #{tpu_custom_call.1} parent=1 // pred_region
      %36 = dma.done [#allocation3], 256
    $region13: #{tpu_custom_call.1} parent=1 // pred_fallthru
      _
    // Predicated region
    $region14: #{tpu_custom_call.1} parent=1 // pred_check
      _
    $region15: #{tpu_custom_call.1} parent=1 // pred_check_branch
      %38 = sbr.rel (0) target = $region17
    $region16: #{tpu_custom_call.1} parent=1 // pred_region
      %39 = dma.done [#allocation6], 256
    $region17: #{tpu_custom_call.1} parent=1 // pred_fallthru
      _
    %v40 = vld [vmem:[#allocation2] sm:$0xff]
    %v41 = vld [vmem:[#allocation2 + $0x8] sm:$0xff]
    %v42 = vld [vmem:[#allocation5] sm:$0xff]
    %v43 = vld [vmem:[#allocation5 + $0x8] sm:$0xff]
    %v44 = vxor.u32 %v40, 2147483648
    %v45 = vxor.u32 %v41, 2147483648
    %v46 = vmul.f32 %v44, 1.442695
    %v47 = vpow.pop %v46
    %v48 = vmul.f32 %v45, 1.442695
    %v49 = vpow.pop %v48
    %v50 = vadd.f32 %v47, 1.0
    %v51 = vadd.f32 %v49, 1.0
    %v52 = vrcp.pop %v50
    %v53 = vmul.f32 1.0, %v52
    %v54 = vrcp.pop %v51
    %v55 = vmul.f32 1.0, %v54
    %v56 = vmax.f32 %v53, 1e-07
    %v57 = vmax.f32 %v55, 1e-07
    %v58 = vmin.f32 %v56, 0.9999999
    %v59 = vmin.f32 %v57, 0.9999999
    %v60 = vsub.f32 1.0, %v58
    %v61 = vsub.f32 1.0, %v59
    %v62 = vlog2.pop %v58
    %v63 = vmul.f32 %v62, 0.6931472
    %v64 = vlog2.pop %v59
    %v65 = vmul.f32 %v64, 0.6931472
    %v66 = vsub.f32 %v63, %v40
    %v67 = vsub.f32 %v65, %v41
    %v68 = vmax.f32 %v66, -16.118095
    %v69 = vmax.f32 %v67, -16.118095
    %v70 = vmin.f32 %v68, -1.0000001e-07
    %v71 = vmin.f32 %v69, -1.0000001e-07
    %v72 = vmul.f32 %v60, %v60
    %v73 = vmul.f32 %v61, %v61
    %v74 = vmul.f32 %v58, %v58
    %v75 = vmul.f32 %v59, %v59
    %v76 = vmul.f32 %v72, -0.25
    %v77 = vmul.f32 %v73, -0.25
    %v78 = vmul.f32 %v76, %v42
    %v79 = vmul.f32 %v77, %v43
    %v80 = vmul.f32 %v78, %v63
    %v81 = vmul.f32 %v79, %v65
    %v82 = vmul.f32 %v74, -0.75
    %v83 = vmul.f32 %v75, -0.75
    %v84 = vsub.f32 1.0, %v42
    %v85 = vsub.f32 1.0, %v43
    %v86 = vmul.f32 %v82, %v84
    %v87 = vmul.f32 %v83, %v85
    %v88 = vmul.f32 %v86, %v70
    %v89 = vmul.f32 %v87, %v71
    %v90 = vadd.f32 %v80, %v88
    %v91 = vadd.f32 %v81, %v89
    %v92 = vadd.f32 %v90, %v91
    %93 = vadd.xlane.f32.xlu0 %v92
    %v94 = vpop.xlane.xlu0 %93
    %v95 = vrot.slane %v94, 4
    %v96 = vadd.f32 %v94, %v95
    %v97 = vrot.slane %v96, 2
    %v98 = vadd.f32 %v96, %v97
    %v99 = vrot.slane %v98, 1
    %v100 = vadd.f32 %v98, %v99
    %s101 = vtos %v100
    %s102 = scalar_lea.smem [#allocation7], 0
    %103 = sst [smem:[%s102]] %s101
    // Predicated region
    $region18: #{tpu_custom_call.1} parent=1 // pred_check
      _
    $region19: #{tpu_custom_call.1} parent=1 // pred_check_branch
      %105 = sbr.rel (0) target = $region21
    $region20: #{tpu_custom_call.1} parent=1 // pred_region
      %s107 = ssub.s32 16, 16
      %108 = vsyncadd [#allocation4], %s107
      %111 = dma.smem_to_hbm [#allocation7], 16, %s2, [#allocation4]
    $region21: #{tpu_custom_call.1} parent=1 // pred_fallthru
      _
    // Predicated region
    $region22: #{tpu_custom_call.1} parent=1 // pred_check
      _
    $region23: #{tpu_custom_call.1} parent=1 // pred_check_branch
      %113 = sbr.rel (0) target = $region25
    $region24: #{tpu_custom_call.1} parent=1 // pred_region
      %114 = dma.done [#allocation4], 16
    $region25: #{tpu_custom_call.1} parent=1 // pred_fallthru
      _
    %115 = sfence
    %116 = vsyncpa [#allocation3], 1
    %117 = vsyncpa [#allocation6], 1
    %118 = vsyncpa [#allocation4], 1

</llo_original>
